<compile_context>
chip_gen: v5e
topology: v5e:2x2
jax: 0.10.0
libtpu: 0.0.40
codegen_flags: <defaults>
</compile_context>

<pallas_src>
import jax
import jax.numpy as jnp
from jax.experimental import pallas as pl
from jax.experimental.pallas import tpu as pltpu


# ----------------------------------------------------------------------------
# Fused classifier kernel:
#   logits = concat([video, audio, language], -1) @ W        (bias=False)
# The concat happens in-register at 768-lane (128-aligned) boundaries, then one
# MXU dot against the whole (2304, N_pad) weight tile.
# ----------------------------------------------------------------------------
def _fused_classifier_kernel(v_ref, a_ref, l_ref, w_ref, o_ref):
    feat = jnp.concatenate([v_ref[...], a_ref[...], l_ref[...]], axis=-1)   # (tm, 3*768)
    o_ref[...] = jnp.dot(feat, w_ref[...], preferred_element_type=jnp.float32)


def video_audio_text_classif(video, audio, language, w_cls, *, block_m=128):
    """video/audio/language: (B, 768) encoder embeddings; w_cls: (3*768, labels) == linear.weight.T."""
    B, D = video.shape
    assert audio.shape == (B, D) and language.shape == (B, D)
    K, labels = w_cls.shape
    assert K == 3 * D

    # bf16 operands (f32 accumulation inside the kernel).
    v = video.astype(jnp.bfloat16)
    a = audio.astype(jnp.bfloat16)
    l = language.astype(jnp.bfloat16)
    w = w_cls.astype(jnp.bfloat16)

    # Lane-dense output: pad the label dimension up to a multiple of 128.
    n_pad = ((labels + 127) // 128) * 128
    if n_pad != labels:
        w = jnp.pad(w, ((0, 0), (0, n_pad - labels)))

    # Batch tiling: full-extent block for tiny B, 128-row tiles otherwise.
    if B > block_m:
        tm = block_m
        b_pad = pl.cdiv(B, tm) * tm
        if b_pad != B:
            pad = ((0, b_pad - B), (0, 0))
            v, a, l = jnp.pad(v, pad), jnp.pad(a, pad), jnp.pad(l, pad)
    else:
        tm = B
        b_pad = B

    act_spec = pl.BlockSpec((tm, D), lambda i: (i, 0))
    w_spec = pl.BlockSpec((K, n_pad), lambda i: (0, 0))     # VMEM-resident across the grid
    out_spec = pl.BlockSpec((tm, n_pad), lambda i: (i, 0))

    out = pl.pallas_call(
        _fused_classifier_kernel,
        out_shape=jax.ShapeDtypeStruct((b_pad, n_pad), jnp.float32),
        grid=(b_pad // tm,),
        in_specs=[act_spec, act_spec, act_spec, w_spec],
        out_specs=out_spec,
        compiler_params=pltpu.CompilerParams(dimension_semantics=("parallel",)),
    )(v, a, l, w)

    return out[:B, :labels]


# ----------------------------------------------------------------------------
# Pure-JAX reference of the same semantics, for a sanity check.
# ----------------------------------------------------------------------------
def _reference(video, audio, language, w_cls):
    feat = jnp.concatenate([video, audio, language], axis=-1)   # (B, 3*768)
    return feat @ w_cls                                         # bias=False


if __name__ == "__main__":
    B, D, labels = 2, 768, 2

    key = jax.random.PRNGKey(0)
    kv, ka, kl, kw = jax.random.split(key, 4)

    # Stand-ins for the LanguageBind backbone per-modality embeddings.
    video = jax.random.normal(kv, (B, D), jnp.float32)      # result['video']
    audio = jax.random.normal(ka, (B, D), jnp.float32)      # result['audio']
    language = jax.random.normal(kl, (B, D), jnp.float32)   # result['language']

    # Classifier weight: linear.weight.T, shape (3*768, labels), bias=False.
    w_cls = 0.02 * jax.random.normal(kw, (3 * D, labels), jnp.float32)

    logits = video_audio_text_classif(video, audio, language, w_cls)
    jax.block_until_ready(logits)

    ref = _reference(video, audio, language, w_cls)
    assert logits.shape == (B, labels), logits.shape
    assert jnp.allclose(logits, ref, atol=5e-2, rtol=5e-2), (logits, ref)

    print("KERNEL_OK")
</pallas_src>

<mosaic_0001>
module attributes {stable_mosaic.version = 11 : i64} {
  func.func @_fused_classifier_kernel(%arg0: i32, %arg1: memref<2x768xbf16, #tpu.memory_space<vmem>>, %arg2: memref<2x768xbf16, #tpu.memory_space<vmem>>, %arg3: memref<2x768xbf16, #tpu.memory_space<vmem>>, %arg4: memref<2304x128xbf16, #tpu.memory_space<vmem>>, %arg5: memref<2x128xf32, #tpu.memory_space<vmem>>) attributes {dimension_semantics = [#tpu.dimension_semantics<parallel>], iteration_bounds = array<i64: 1>, scalar_prefetch = 0 : i64, scratch_operands = 0 : i64, tpu.core_type = #tpu.core_type<tc>, window_params = [{transform_indices = @transform_0, window_bounds = array<i64: 2, 768>}, {transform_indices = @transform_1, window_bounds = array<i64: 2, 768>}, {transform_indices = @transform_2, window_bounds = array<i64: 2, 768>}, {pipeline_mode = #tpu.pipeline_mode<synchronous>, transform_indices = @transform_3, window_bounds = array<i64: 2304, 128>}, {transform_indices = @transform_4, window_bounds = array<i64: 2, 128>}]} {
    %c0 = arith.constant 0 : index
    %c0_0 = arith.constant 0 : index
    %0 = vector.load %arg1[%c0, %c0_0] : memref<2x768xbf16, #tpu.memory_space<vmem>>, vector<2x768xbf16>
    %c0_1 = arith.constant 0 : index
    %c0_2 = arith.constant 0 : index
    %1 = vector.load %arg2[%c0_1, %c0_2] : memref<2x768xbf16, #tpu.memory_space<vmem>>, vector<2x768xbf16>
    %c0_3 = arith.constant 0 : index
    %c0_4 = arith.constant 0 : index
    %2 = vector.load %arg3[%c0_3, %c0_4] : memref<2x768xbf16, #tpu.memory_space<vmem>>, vector<2x768xbf16>
    %3 = tpu.concatenate %0, %1, %2 in 1 : vector<2x768xbf16>, vector<2x768xbf16>, vector<2x768xbf16> -> vector<2x2304xbf16>
    %c0_5 = arith.constant 0 : index
    %c0_6 = arith.constant 0 : index
    %4 = vector.load %arg4[%c0_5, %c0_6] : memref<2304x128xbf16, #tpu.memory_space<vmem>>, vector<2304x128xbf16>
    %cst = arith.constant dense<0.000000e+00> : vector<2x128xf32>
    %5 = tpu.matmul %3, %4, %cst {dimension_numbers = #tpu.dot_dimension_numbers<[1], [0], [0], [1], [0, 0, 1, 1], [], []>} : vector<2x2304xbf16>, vector<2304x128xbf16>, vector<2x128xf32> -> vector<2x128xf32>
    %c0_7 = arith.constant 0 : index
    %c0_8 = arith.constant 0 : index
    %6 = vector.load %arg5[%c0_7, %c0_8] : memref<2x128xf32, #tpu.memory_space<vmem>>, vector<2x128xf32>
    tpu.vector_store %arg5[%c0_7, %c0_8], %5 {strides = array<i32>} : memref<2x128xf32, #tpu.memory_space<vmem>>, vector<2x128xf32>,
    return
  }
  func.func @transform_0(%arg0: i32) -> (i32, i32) {
    %c0_i32 = arith.constant 0 : i32
    %c0_i32_0 = arith.constant 0 : i32
    return %arg0, %c0_i32 : i32, i32
  }
  func.func @transform_1(%arg0: i32) -> (i32, i32) {
    %c0_i32 = arith.constant 0 : i32
    %c0_i32_0 = arith.constant 0 : i32
    return %arg0, %c0_i32 : i32, i32
  }
  func.func @transform_2(%arg0: i32) -> (i32, i32) {
    %c0_i32 = arith.constant 0 : i32
    %c0_i32_0 = arith.constant 0 : i32
    return %arg0, %c0_i32 : i32, i32
  }
  func.func @transform_3(%arg0: i32) -> (i32, i32) {
    %c0_i32 = arith.constant 0 : i32
    %c0_i32_0 = arith.constant 0 : i32
    %c0_i32_1 = arith.constant 0 : i32
    return %c0_i32, %c0_i32_0 : i32, i32
  }
  func.func @transform_4(%arg0: i32) -> (i32, i32) {
    %c0_i32 = arith.constant 0 : i32
    %c0_i32_0 = arith.constant 0 : i32
    return %arg0, %c0_i32 : i32, i32
  }
}

</mosaic_0001>

<llo_original>
// kernel: tpu_custom_call.1
$region0: #{tpu_custom_call.1}
  #allocation0 [shape = 'u32[]', space=smem, size = 0x4, offset = 0x4, fixed_abs, tag = 'smem constant byte address 0x4 - core index']
  #allocation1 [shape = 'u32[72,128]{1,0:T(1,128)}', space=vmem, size = 0x9000, scoped, tag = 'internal scratch']
  %s0 = inlined_call_operand.hbm [shape: bf16[2,768], index: 0, kind: input, shape index: {}]
  %s1 = inlined_call_operand.hbm [shape: bf16[2,768], index: 1, kind: input, shape index: {}]
  %s2 = inlined_call_operand.hbm [shape: bf16[2,768], index: 2, kind: input, shape index: {}]
  %s3 = inlined_call_operand.hbm [shape: bf16[2304,128], index: 3, kind: input, shape index: {}]
  %s4 = inlined_call_operand.hbm [shape: f32[2,128], index: 4, kind: output, shape index: {}]
  %s5 = sld [smem:[#allocation0]]
  $region42: #{tpu_custom_call.1} parent=0
    _
  %s7 = ssub.s32 1, %s5
  %s8 = scalar_select 0, %s7, %s5
  $region1: #{tpu_custom_call.1} parent=0
    #allocation2 [shape = 'u8[3072]{0}', space=vmem, size = 0xc00, scoped, tag = 'input window, operand 0, single buffered']
    #allocation3 [shape = 's32[1]{0}', space=sflag, size = 0x4, scoped, tag = 'scoped memory for tpu_custom_call.1']
    #allocation4 [shape = 's32[1]{0}', space=sflag, size = 0x4, scoped, tag = 'scoped memory for tpu_custom_call.1']
    #allocation5 [shape = 'u8[3072]{0}', space=vmem, size = 0xc00, scoped, tag = 'input window, operand 1, single buffered']
    #allocation6 [shape = 's32[1]{0}', space=sflag, size = 0x4, scoped, tag = 'scoped memory for tpu_custom_call.1']
    #allocation7 [shape = 'u8[3072]{0}', space=vmem, size = 0xc00, scoped, tag = 'input window, operand 2, single buffered']
    #allocation8 [shape = 'u8[589824]{0}', space=vmem, size = 0x90000, scoped, tag = 'input window, operand 3, single buffered']
    #allocation9 [shape = 's32[1]{0}', space=sflag, size = 0x4, scoped, tag = 'scoped memory for tpu_custom_call.1']
    #allocation10 [shape = 'u8[1024]{0}', space=vmem, size = 0x400, scoped, tag = 'output window, operand 0, single buffered']
    %9 = vsyncpa [#allocation3], 0
    %10 = vsyncpa [#allocation6], 0
    %11 = vsyncpa [#allocation9], 0
    %12 = vsyncpa [#allocation4], 0
    // Predicated region
    $region2: #{tpu_custom_call.1} parent=1 // pred_check
      _
    $region3: #{tpu_custom_call.1} parent=1 // pred_check_branch
      %14 = sbr.rel (0) target = $region5
    $region4: #{tpu_custom_call.1} parent=1 // pred_region
      %16 = vsyncadd [#allocation3], 0
      %s18 = sshll.u32 %s0, 4
      %s19 = int_to_ptr.hbm [resolvable:$true] %s18
      %s20 = sshll.u32 [#allocation2], 4
      %s21 = int_to_ptr.vmem [resolvable:$true] %s20
      %23 = dma.hbm_to_vmem [thread:$0]  %s19, 96, %s21, [#allocation3]
    $region5: #{tpu_custom_call.1} parent=1 // pred_fallthru
      _
    // Predicated region
    $region6: #{tpu_custom_call.1} parent=1 // pred_check
      _
    $region7: #{tpu_custom_call.1} parent=1 // pred_check_branch
      %25 = sbr.rel (0) target = $region9
    $region8: #{tpu_custom_call.1} parent=1 // pred_region
      %27 = vsyncadd [#allocation6], 0
      %s29 = sshll.u32 %s1, 4
      %s30 = int_to_ptr.hbm [resolvable:$true] %s29
      %s31 = sshll.u32 [#allocation5], 4
      %s32 = int_to_ptr.vmem [resolvable:$true] %s31
      %34 = dma.hbm_to_vmem [thread:$0]  %s30, 96, %s32, [#allocation6]
    $region9: #{tpu_custom_call.1} parent=1 // pred_fallthru
      _
    // Predicated region
    $region10: #{tpu_custom_call.1} parent=1 // pred_check
      _
    $region11: #{tpu_custom_call.1} parent=1 // pred_check_branch
      %36 = sbr.rel (0) target = $region13
    $region12: #{tpu_custom_call.1} parent=1 // pred_region
      %38 = vsyncadd [#allocation6], 0
      %s40 = sshll.u32 %s2, 4
      %s41 = int_to_ptr.hbm [resolvable:$true] %s40
      %s42 = sshll.u32 [#allocation7], 4
      %s43 = int_to_ptr.vmem [resolvable:$true] %s42
      %45 = dma.hbm_to_vmem [thread:$0]  %s41, 96, %s43, [#allocation6]
    $region13: #{tpu_custom_call.1} parent=1 // pred_fallthru
      _
    // Predicated region
    $region14: #{tpu_custom_call.1} parent=1 // pred_check
      _
    $region15: #{tpu_custom_call.1} parent=1 // pred_check_branch
      %47 = sbr.rel (0) target = $region17
    $region16: #{tpu_custom_call.1} parent=1 // pred_region
      %49 = vsyncadd [#allocation9], 0
      %s50 = sshll.u32 %s3, 4
      %s51 = int_to_ptr.hbm [resolvable:$true] %s50
      %s52 = sshll.u32 [#allocation8], 4
      %s53 = int_to_ptr.vmem [resolvable:$true] %s52
      %58 = dma.hbm_to_vmem [thread:$0]  %s51, 18432, %s53, [#allocation9], 64, 64, 4
    $region17: #{tpu_custom_call.1} parent=1 // pred_fallthru
      _
    // Predicated region
    $region18: #{tpu_custom_call.1} parent=1 // pred_check
      _
    $region19: #{tpu_custom_call.1} parent=1 // pred_check_branch
      %60 = sbr.rel (0) target = $region21
    $region20: #{tpu_custom_call.1} parent=1 // pred_region
      %62 = dma.done [#allocation3], 96
    $region21: #{tpu_custom_call.1} parent=1 // pred_fallthru
      _
    // Predicated region
    $region22: #{tpu_custom_call.1} parent=1 // pred_check
      _
    $region23: #{tpu_custom_call.1} parent=1 // pred_check_branch
      %64 = sbr.rel (0) target = $region25
    $region24: #{tpu_custom_call.1} parent=1 // pred_region
      %66 = dma.done [#allocation6], 96
    $region25: #{tpu_custom_call.1} parent=1 // pred_fallthru
      _
    // Predicated region
    $region26: #{tpu_custom_call.1} parent=1 // pred_check
      _
    $region27: #{tpu_custom_call.1} parent=1 // pred_check_branch
      %68 = sbr.rel (0) target = $region29
    $region28: #{tpu_custom_call.1} parent=1 // pred_region
      %70 = dma.done [#allocation6], 96
    $region29: #{tpu_custom_call.1} parent=1 // pred_fallthru
      _
    // Predicated region
    $region30: #{tpu_custom_call.1} parent=1 // pred_check
      _
    $region31: #{tpu_custom_call.1} parent=1 // pred_check_branch
      %72 = sbr.rel (0) target = $region33
    $region32: #{tpu_custom_call.1} parent=1 // pred_region
      %74 = dma.done [#allocation9], 18432
    $region33: #{tpu_custom_call.1} parent=1 // pred_fallthru
      _
    %v75 = vld [vmem:[#allocation2] sm:$0x3f]
    %v76 = vld [vmem:[#allocation5] sm:$0x3f]
    %v77 = vld [vmem:[#allocation7] sm:$0x3f]
    %79 = vst [vmem:[#allocation1] ss:$9 sm:$0xff] %v75
    %v80 = vld [vmem:[#allocation1] sm:$0xff]
    %v81 = vld [vmem:[#allocation1 + $0x9] sm:$0xff]
    %v82 = vld [vmem:[#allocation1 + $0x12] sm:$0xff]
    %v83 = vld [vmem:[#allocation1 + $0x1b] sm:$0xff]
    %v84 = vld [vmem:[#allocation1 + $0x24] sm:$0xff]
    %v85 = vld [vmem:[#allocation1 + $0x2d] sm:$0xff]
    %93 = vst [vmem:[#allocation1] ss:$9 sm:$0xff] %v76
    %v94 = vld [vmem:[#allocation1] sm:$0xff]
    %v95 = vld [vmem:[#allocation1 + $0x9] sm:$0xff]
    %v96 = vld [vmem:[#allocation1 + $0x12] sm:$0xff]
    %v97 = vld [vmem:[#allocation1 + $0x1b] sm:$0xff]
    %v98 = vld [vmem:[#allocation1 + $0x24] sm:$0xff]
    %v99 = vld [vmem:[#allocation1 + $0x2d] sm:$0xff]
    %107 = vst [vmem:[#allocation1] ss:$9 sm:$0xff] %v77
    %v108 = vld [vmem:[#allocation1] sm:$0xff]
    %v109 = vld [vmem:[#allocation1 + $0x9] sm:$0xff]
    %v110 = vld [vmem:[#allocation1 + $0x12] sm:$0xff]
    %v111 = vld [vmem:[#allocation1 + $0x1b] sm:$0xff]
    %v112 = vld [vmem:[#allocation1 + $0x24] sm:$0xff]
    %v113 = vld [vmem:[#allocation1 + $0x2d] sm:$0xff]
    %v120 = vld [vmem:[#allocation8] sm:$0xf]
    %v121 = vld [vmem:[#allocation8 + $0x4] sm:$0xf]
    %v122 = vld [vmem:[#allocation8 + $0x8] sm:$0xf]
    %v123 = vld [vmem:[#allocation8 + $0xc] sm:$0xf]
    %v124 = vld [vmem:[#allocation8 + $0x10] sm:$0xf]
    %v125 = vld [vmem:[#allocation8 + $0x14] sm:$0xf]
    %v126 = vld [vmem:[#allocation8 + $0x18] sm:$0xf]
    %v127 = vld [vmem:[#allocation8 + $0x1c] sm:$0xf]
    %v128 = vld [vmem:[#allocation8 + $0x20] sm:$0xf]
    %v129 = vld [vmem:[#allocation8 + $0x24] sm:$0xf]
    %v130 = vld [vmem:[#allocation8 + $0x28] sm:$0xf]
    %v131 = vld [vmem:[#allocation8 + $0x2c] sm:$0xf]
    %v132 = vld [vmem:[#allocation8 + $0x30] sm:$0xf]
    %v133 = vld [vmem:[#allocation8 + $0x34] sm:$0xf]
    %v134 = vld [vmem:[#allocation8 + $0x38] sm:$0xf]
    %v135 = vld [vmem:[#allocation8 + $0x3c] sm:$0xf]
    %v136 = vld [vmem:[#allocation8 + $0x40] sm:$0xf]
    %v137 = vld [vmem:[#allocation8 + $0x44] sm:$0xf]
    %v138 = vld [vmem:[#allocation8 + $0x48] sm:$0xf]
    %v139 = vld [vmem:[#allocation8 + $0x4c] sm:$0xf]
    %v140 = vld [vmem:[#allocation8 + $0x50] sm:$0xf]
    %v141 = vld [vmem:[#allocation8 + $0x54] sm:$0xf]
    %v142 = vld [vmem:[#allocation8 + $0x58] sm:$0xf]
    %v143 = vld [vmem:[#allocation8 + $0x5c] sm:$0xf]
    %v144 = vld [vmem:[#allocation8 + $0x60] sm:$0xf]
    %v145 = vld [vmem:[#allocation8 + $0x64] sm:$0xf]
    %v146 = vld [vmem:[#allocation8 + $0x68] sm:$0xf]
    %v147 = vld [vmem:[#allocation8 + $0x6c] sm:$0xf]
    %v148 = vld [vmem:[#allocation8 + $0x70] sm:$0xf]
    %v149 = vld [vmem:[#allocation8 + $0x74] sm:$0xf]
    %v150 = vld [vmem:[#allocation8 + $0x78] sm:$0xf]
    %v151 = vld [vmem:[#allocation8 + $0x7c] sm:$0xf]
    %v152 = vld [vmem:[#allocation8 + $0x80] sm:$0xf]
    %v153 = vld [vmem:[#allocation8 + $0x84] sm:$0xf]
    %v154 = vld [vmem:[#allocation8 + $0x88] sm:$0xf]
    %v155 = vld [vmem:[#allocation8 + $0x8c] sm:$0xf]
    %v156 = vld [vmem:[#allocation8 + $0x90] sm:$0xf]
    %v157 = vld [vmem:[#allocation8 + $0x94] sm:$0xf]
    %v158 = vld [vmem:[#allocation8 + $0x98] sm:$0xf]
    %v159 = vld [vmem:[#allocation8 + $0x9c] sm:$0xf]
    %v160 = vld [vmem:[#allocation8 + $0xa0] sm:$0xf]
    %v161 = vld [vmem:[#allocation8 + $0xa4] sm:$0xf]
    %v162 = vld [vmem:[#allocation8 + $0xa8] sm:$0xf]
    %v163 = vld [vmem:[#allocation8 + $0xac] sm:$0xf]
    %v164 = vld [vmem:[#allocation8 + $0xb0] sm:$0xf]
    %v165 = vld [vmem:[#allocation8 + $0xb4] sm:$0xf]
    %v166 = vld [vmem:[#allocation8 + $0xb8] sm:$0xf]
    %v167 = vld [vmem:[#allocation8 + $0xbc] sm:$0xf]
    %v168 = vld [vmem:[#allocation8 + $0xc0] sm:$0xf]
    %v169 = vld [vmem:[#allocation8 + $0xc4] sm:$0xf]
    %v170 = vld [vmem:[#allocation8 + $0xc8] sm:$0xf]
    %v171 = vld [vmem:[#allocation8 + $0xcc] sm:$0xf]
    %v172 = vld [vmem:[#allocation8 + $0xd0] sm:$0xf]
    %v173 = vld [vmem:[#allocation8 + $0xd4] sm:$0xf]
    %v174 = vld [vmem:[#allocation8 + $0xd8] sm:$0xf]
    %v175 = vld [vmem:[#allocation8 + $0xdc] sm:$0xf]
    %v176 = vld [vmem:[#allocation8 + $0xe0] sm:$0xf]
    %v177 = vld [vmem:[#allocation8 + $0xe4] sm:$0xf]
    %v178 = vld [vmem:[#allocation8 + $0xe8] sm:$0xf]
    %v179 = vld [vmem:[#allocation8 + $0xec] sm:$0xf]
    %v180 = vld [vmem:[#allocation8 + $0xf0] sm:$0xf]
    %v181 = vld [vmem:[#allocation8 + $0xf4] sm:$0xf]
    %v182 = vld [vmem:[#allocation8 + $0xf8] sm:$0xf]
    %v183 = vld [vmem:[#allocation8 + $0xfc] sm:$0xf]
    %v184 = vld [vmem:[#allocation8 + $0x100] sm:$0xf]
    %v185 = vld [vmem:[#allocation8 + $0x104] sm:$0xf]
    %v186 = vld [vmem:[#allocation8 + $0x108] sm:$0xf]
    %v187 = vld [vmem:[#allocation8 + $0x10c] sm:$0xf]
    %v188 = vld [vmem:[#allocation8 + $0x110] sm:$0xf]
    %v189 = vld [vmem:[#allocation8 + $0x114] sm:$0xf]
    %v190 = vld [vmem:[#allocation8 + $0x118] sm:$0xf]
    %v191 = vld [vmem:[#allocation8 + $0x11c] sm:$0xf]
    %v192 = vld [vmem:[#allocation8 + $0x120] sm:$0xf]
    %v193 = vld [vmem:[#allocation8 + $0x124] sm:$0xf]
    %v194 = vld [vmem:[#allocation8 + $0x128] sm:$0xf]
    %v195 = vld [vmem:[#allocation8 + $0x12c] sm:$0xf]
    %v196 = vld [vmem:[#allocation8 + $0x130] sm:$0xf]
    %v197 = vld [vmem:[#allocation8 + $0x134] sm:$0xf]
    %v198 = vld [vmem:[#allocation8 + $0x138] sm:$0xf]
    %v199 = vld [vmem:[#allocation8 + $0x13c] sm:$0xf]
    %v200 = vld [vmem:[#allocation8 + $0x140] sm:$0xf]
    %v201 = vld [vmem:[#allocation8 + $0x144] sm:$0xf]
    %v202 = vld [vmem:[#allocation8 + $0x148] sm:$0xf]
    %v203 = vld [vmem:[#allocation8 + $0x14c] sm:$0xf]
    %v204 = vld [vmem:[#allocation8 + $0x150] sm:$0xf]
    %v205 = vld [vmem:[#allocation8 + $0x154] sm:$0xf]
    %v206 = vld [vmem:[#allocation8 + $0x158] sm:$0xf]
    %v207 = vld [vmem:[#allocation8 + $0x15c] sm:$0xf]
    %v208 = vld [vmem:[#allocation8 + $0x160] sm:$0xf]
    %v209 = vld [vmem:[#allocation8 + $0x164] sm:$0xf]
    %v210 = vld [vmem:[#allocation8 + $0x168] sm:$0xf]
    %v211 = vld [vmem:[#allocation8 + $0x16c] sm:$0xf]
    %v212 = vld [vmem:[#allocation8 + $0x170] sm:$0xf]
    %v213 = vld [vmem:[#allocation8 + $0x174] sm:$0xf]
    %v214 = vld [vmem:[#allocation8 + $0x178] sm:$0xf]
    %v215 = vld [vmem:[#allocation8 + $0x17c] sm:$0xf]
    %v216 = vld [vmem:[#allocation8 + $0x180] sm:$0xf]
    %v217 = vld [vmem:[#allocation8 + $0x184] sm:$0xf]
    %v218 = vld [vmem:[#allocation8 + $0x188] sm:$0xf]
    %v219 = vld [vmem:[#allocation8 + $0x18c] sm:$0xf]
    %v220 = vld [vmem:[#allocation8 + $0x190] sm:$0xf]
    %v221 = vld [vmem:[#allocation8 + $0x194] sm:$0xf]
    %v222 = vld [vmem:[#allocation8 + $0x198] sm:$0xf]
    %v223 = vld [vmem:[#allocation8 + $0x19c] sm:$0xf]
    %v224 = vld [vmem:[#allocation8 + $0x1a0] sm:$0xf]
    %v225 = vld [vmem:[#allocation8 + $0x1a4] sm:$0xf]
    %v226 = vld [vmem:[#allocation8 + $0x1a8] sm:$0xf]
    %v227 = vld [vmem:[#allocation8 + $0x1ac] sm:$0xf]
    %v228 = vld [vmem:[#allocation8 + $0x1b0] sm:$0xf]
    %v229 = vld [vmem:[#allocation8 + $0x1b4] sm:$0xf]
    %v230 = vld [vmem:[#allocation8 + $0x1b8] sm:$0xf]
    %v231 = vld [vmem:[#allocation8 + $0x1bc] sm:$0xf]
    %v232 = vld [vmem:[#allocation8 + $0x1c0] sm:$0xf]
    %v233 = vld [vmem:[#allocation8 + $0x1c4] sm:$0xf]
    %v234 = vld [vmem:[#allocation8 + $0x1c8] sm:$0xf]
    %v235 = vld [vmem:[#allocation8 + $0x1cc] sm:$0xf]
    %v236 = vld [vmem:[#allocation8 + $0x1d0] sm:$0xf]
    %v237 = vld [vmem:[#allocation8 + $0x1d4] sm:$0xf]
    %v238 = vld [vmem:[#allocation8 + $0x1d8] sm:$0xf]
    %v239 = vld [vmem:[#allocation8 + $0x1dc] sm:$0xf]
    %v240 = vld [vmem:[#allocation8 + $0x1e0] sm:$0xf]
    %v241 = vld [vmem:[#allocation8 + $0x1e4] sm:$0xf]
    %v242 = vld [vmem:[#allocation8 + $0x1e8] sm:$0xf]
    %v243 = vld [vmem:[#allocation8 + $0x1ec] sm:$0xf]
    %v244 = vld [vmem:[#allocation8 + $0x1f0] sm:$0xf]
    %v245 = vld [vmem:[#allocation8 + $0x1f4] sm:$0xf]
    %v246 = vld [vmem:[#allocation8 + $0x1f8] sm:$0xf]
    %v247 = vld [vmem:[#allocation8 + $0x1fc] sm:$0xf]
    %v248 = vld [vmem:[#allocation8 + $0x200] sm:$0xf]
    %v249 = vld [vmem:[#allocation8 + $0x204] sm:$0xf]
    %v250 = vld [vmem:[#allocation8 + $0x208] sm:$0xf]
    %v251 = vld [vmem:[#allocation8 + $0x20c] sm:$0xf]
    %v252 = vld [vmem:[#allocation8 + $0x210] sm:$0xf]
    %v253 = vld [vmem:[#allocation8 + $0x214] sm:$0xf]
    %v254 = vld [vmem:[#allocation8 + $0x218] sm:$0xf]
    %v255 = vld [vmem:[#allocation8 + $0x21c] sm:$0xf]
    %v256 = vld [vmem:[#allocation8 + $0x220] sm:$0xf]
    %v257 = vld [vmem:[#allocation8 + $0x224] sm:$0xf]
    %v258 = vld [vmem:[#allocation8 + $0x228] sm:$0xf]
    %v259 = vld [vmem:[#allocation8 + $0x22c] sm:$0xf]
    %v260 = vld [vmem:[#allocation8 + $0x230] sm:$0xf]
    %v261 = vld [vmem:[#allocation8 + $0x234] sm:$0xf]
    %v262 = vld [vmem:[#allocation8 + $0x238] sm:$0xf]
    %v263 = vld [vmem:[#allocation8 + $0x23c] sm:$0xf]
    %v264 = vld [vmem:[#allocation8 + $0x240] sm:$0xf]
    %v265 = vld [vmem:[#allocation8 + $0x244] sm:$0xf]
    %v266 = vld [vmem:[#allocation8 + $0x248] sm:$0xf]
    %v267 = vld [vmem:[#allocation8 + $0x24c] sm:$0xf]
    %v268 = vld [vmem:[#allocation8 + $0x250] sm:$0xf]
    %v269 = vld [vmem:[#allocation8 + $0x254] sm:$0xf]
    %v270 = vld [vmem:[#allocation8 + $0x258] sm:$0xf]
    %v271 = vld [vmem:[#allocation8 + $0x25c] sm:$0xf]
    %v272 = vld [vmem:[#allocation8 + $0x260] sm:$0xf]
    %v273 = vld [vmem:[#allocation8 + $0x264] sm:$0xf]
    %v274 = vld [vmem:[#allocation8 + $0x268] sm:$0xf]
    %v275 = vld [vmem:[#allocation8 + $0x26c] sm:$0xf]
    %v276 = vld [vmem:[#allocation8 + $0x270] sm:$0xf]
    %v277 = vld [vmem:[#allocation8 + $0x274] sm:$0xf]
    %v278 = vld [vmem:[#allocation8 + $0x278] sm:$0xf]
    %v279 = vld [vmem:[#allocation8 + $0x27c] sm:$0xf]
    %v280 = vld [vmem:[#allocation8 + $0x280] sm:$0xf]
    %v281 = vld [vmem:[#allocation8 + $0x284] sm:$0xf]
    %v282 = vld [vmem:[#allocation8 + $0x288] sm:$0xf]
    %v283 = vld [vmem:[#allocation8 + $0x28c] sm:$0xf]
    %v284 = vld [vmem:[#allocation8 + $0x290] sm:$0xf]
    %v285 = vld [vmem:[#allocation8 + $0x294] sm:$0xf]
    %v286 = vld [vmem:[#allocation8 + $0x298] sm:$0xf]
    %v287 = vld [vmem:[#allocation8 + $0x29c] sm:$0xf]
    %v288 = vld [vmem:[#allocation8 + $0x2a0] sm:$0xf]
    %v289 = vld [vmem:[#allocation8 + $0x2a4] sm:$0xf]
    %v290 = vld [vmem:[#allocation8 + $0x2a8] sm:$0xf]
    %v291 = vld [vmem:[#allocation8 + $0x2ac] sm:$0xf]
    %v292 = vld [vmem:[#allocation8 + $0x2b0] sm:$0xf]
    %v293 = vld [vmem:[#allocation8 + $0x2b4] sm:$0xf]
    %v294 = vld [vmem:[#allocation8 + $0x2b8] sm:$0xf]
    %v295 = vld [vmem:[#allocation8 + $0x2bc] sm:$0xf]
    %v296 = vld [vmem:[#allocation8 + $0x2c0] sm:$0xf]
    %v297 = vld [vmem:[#allocation8 + $0x2c4] sm:$0xf]
    %v298 = vld [vmem:[#allocation8 + $0x2c8] sm:$0xf]
    %v299 = vld [vmem:[#allocation8 + $0x2cc] sm:$0xf]
    %v300 = vld [vmem:[#allocation8 + $0x2d0] sm:$0xf]
    %v301 = vld [vmem:[#allocation8 + $0x2d4] sm:$0xf]
    %v302 = vld [vmem:[#allocation8 + $0x2d8] sm:$0xf]
    %v303 = vld [vmem:[#allocation8 + $0x2dc] sm:$0xf]
    %v304 = vld [vmem:[#allocation8 + $0x2e0] sm:$0xf]
    %v305 = vld [vmem:[#allocation8 + $0x2e4] sm:$0xf]
    %v306 = vld [vmem:[#allocation8 + $0x2e8] sm:$0xf]
    %v307 = vld [vmem:[#allocation8 + $0x2ec] sm:$0xf]
    %v308 = vld [vmem:[#allocation8 + $0x2f0] sm:$0xf]
    %v309 = vld [vmem:[#allocation8 + $0x2f4] sm:$0xf]
    %v310 = vld [vmem:[#allocation8 + $0x2f8] sm:$0xf]
    %v311 = vld [vmem:[#allocation8 + $0x2fc] sm:$0xf]
    %v312 = vld [vmem:[#allocation8 + $0x300] sm:$0xf]
    %v313 = vld [vmem:[#allocation8 + $0x304] sm:$0xf]
    %v314 = vld [vmem:[#allocation8 + $0x308] sm:$0xf]
    %v315 = vld [vmem:[#allocation8 + $0x30c] sm:$0xf]
    %v316 = vld [vmem:[#allocation8 + $0x310] sm:$0xf]
    %v317 = vld [vmem:[#allocation8 + $0x314] sm:$0xf]
    %v318 = vld [vmem:[#allocation8 + $0x318] sm:$0xf]
    %v319 = vld [vmem:[#allocation8 + $0x31c] sm:$0xf]
    %v320 = vld [vmem:[#allocation8 + $0x320] sm:$0xf]
    %v321 = vld [vmem:[#allocation8 + $0x324] sm:$0xf]
    %v322 = vld [vmem:[#allocation8 + $0x328] sm:$0xf]
    %v323 = vld [vmem:[#allocation8 + $0x32c] sm:$0xf]
    %v324 = vld [vmem:[#allocation8 + $0x330] sm:$0xf]
    %v325 = vld [vmem:[#allocation8 + $0x334] sm:$0xf]
    %v326 = vld [vmem:[#allocation8 + $0x338] sm:$0xf]
    %v327 = vld [vmem:[#allocation8 + $0x33c] sm:$0xf]
    %v328 = vld [vmem:[#allocation8 + $0x340] sm:$0xf]
    %v329 = vld [vmem:[#allocation8 + $0x344] sm:$0xf]
    %v330 = vld [vmem:[#allocation8 + $0x348] sm:$0xf]
    %v331 = vld [vmem:[#allocation8 + $0x34c] sm:$0xf]
    %v332 = vld [vmem:[#allocation8 + $0x350] sm:$0xf]
    %v333 = vld [vmem:[#allocation8 + $0x354] sm:$0xf]
    %v334 = vld [vmem:[#allocation8 + $0x358] sm:$0xf]
    %v335 = vld [vmem:[#allocation8 + $0x35c] sm:$0xf]
    %v336 = vld [vmem:[#allocation8 + $0x360] sm:$0xf]
    %v337 = vld [vmem:[#allocation8 + $0x364] sm:$0xf]
    %v338 = vld [vmem:[#allocation8 + $0x368] sm:$0xf]
    %v339 = vld [vmem:[#allocation8 + $0x36c] sm:$0xf]
    %v340 = vld [vmem:[#allocation8 + $0x370] sm:$0xf]
    %v341 = vld [vmem:[#allocation8 + $0x374] sm:$0xf]
    %v342 = vld [vmem:[#allocation8 + $0x378] sm:$0xf]
    %v343 = vld [vmem:[#allocation8 + $0x37c] sm:$0xf]
    %v344 = vld [vmem:[#allocation8 + $0x380] sm:$0xf]
    %v345 = vld [vmem:[#allocation8 + $0x384] sm:$0xf]
    %v346 = vld [vmem:[#allocation8 + $0x388] sm:$0xf]
    %v347 = vld [vmem:[#allocation8 + $0x38c] sm:$0xf]
    %v348 = vld [vmem:[#allocation8 + $0x390] sm:$0xf]
    %v349 = vld [vmem:[#allocation8 + $0x394] sm:$0xf]
    %v350 = vld [vmem:[#allocation8 + $0x398] sm:$0xf]
    %v351 = vld [vmem:[#allocation8 + $0x39c] sm:$0xf]
    %v352 = vld [vmem:[#allocation8 + $0x3a0] sm:$0xf]
    %v353 = vld [vmem:[#allocation8 + $0x3a4] sm:$0xf]
    %v354 = vld [vmem:[#allocation8 + $0x3a8] sm:$0xf]
    %v355 = vld [vmem:[#allocation8 + $0x3ac] sm:$0xf]
    %v356 = vld [vmem:[#allocation8 + $0x3b0] sm:$0xf]
    %v357 = vld [vmem:[#allocation8 + $0x3b4] sm:$0xf]
    %v358 = vld [vmem:[#allocation8 + $0x3b8] sm:$0xf]
    %v359 = vld [vmem:[#allocation8 + $0x3bc] sm:$0xf]
    %v360 = vld [vmem:[#allocation8 + $0x3c0] sm:$0xf]
    %v361 = vld [vmem:[#allocation8 + $0x3c4] sm:$0xf]
    %v362 = vld [vmem:[#allocation8 + $0x3c8] sm:$0xf]
    %v363 = vld [vmem:[#allocation8 + $0x3cc] sm:$0xf]
    %v364 = vld [vmem:[#allocation8 + $0x3d0] sm:$0xf]
    %v365 = vld [vmem:[#allocation8 + $0x3d4] sm:$0xf]
    %v366 = vld [vmem:[#allocation8 + $0x3d8] sm:$0xf]
    %v367 = vld [vmem:[#allocation8 + $0x3dc] sm:$0xf]
    %v368 = vld [vmem:[#allocation8 + $0x3e0] sm:$0xf]
    %v369 = vld [vmem:[#allocation8 + $0x3e4] sm:$0xf]
    %v370 = vld [vmem:[#allocation8 + $0x3e8] sm:$0xf]
    %v371 = vld [vmem:[#allocation8 + $0x3ec] sm:$0xf]
    %v372 = vld [vmem:[#allocation8 + $0x3f0] sm:$0xf]
    %v373 = vld [vmem:[#allocation8 + $0x3f4] sm:$0xf]
    %v374 = vld [vmem:[#allocation8 + $0x3f8] sm:$0xf]
    %v375 = vld [vmem:[#allocation8 + $0x3fc] sm:$0xf]
    %v376 = vld [vmem:[#allocation8 + $0x400] sm:$0xf]
    %v377 = vld [vmem:[#allocation8 + $0x404] sm:$0xf]
    %v378 = vld [vmem:[#allocation8 + $0x408] sm:$0xf]
    %v379 = vld [vmem:[#allocation8 + $0x40c] sm:$0xf]
    %v380 = vld [vmem:[#allocation8 + $0x410] sm:$0xf]
    %v381 = vld [vmem:[#allocation8 + $0x414] sm:$0xf]
    %v382 = vld [vmem:[#allocation8 + $0x418] sm:$0xf]
    %v383 = vld [vmem:[#allocation8 + $0x41c] sm:$0xf]
    %v384 = vld [vmem:[#allocation8 + $0x420] sm:$0xf]
    %v385 = vld [vmem:[#allocation8 + $0x424] sm:$0xf]
    %v386 = vld [vmem:[#allocation8 + $0x428] sm:$0xf]
    %v387 = vld [vmem:[#allocation8 + $0x42c] sm:$0xf]
    %v388 = vld [vmem:[#allocation8 + $0x430] sm:$0xf]
    %v389 = vld [vmem:[#allocation8 + $0x434] sm:$0xf]
    %v390 = vld [vmem:[#allocation8 + $0x438] sm:$0xf]
    %v391 = vld [vmem:[#allocation8 + $0x43c] sm:$0xf]
    %v392 = vld [vmem:[#allocation8 + $0x440] sm:$0xf]
    %v393 = vld [vmem:[#allocation8 + $0x444] sm:$0xf]
    %v394 = vld [vmem:[#allocation8 + $0x448] sm:$0xf]
    %v395 = vld [vmem:[#allocation8 + $0x44c] sm:$0xf]
    %v396 = vld [vmem:[#allocation8 + $0x450] sm:$0xf]
    %v397 = vld [vmem:[#allocation8 + $0x454] sm:$0xf]
    %v398 = vld [vmem:[#allocation8 + $0x458] sm:$0xf]
    %v399 = vld [vmem:[#allocation8 + $0x45c] sm:$0xf]
    %v400 = vld [vmem:[#allocation8 + $0x460] sm:$0xf]
    %v401 = vld [vmem:[#allocation8 + $0x464] sm:$0xf]
    %v402 = vld [vmem:[#allocation8 + $0x468] sm:$0xf]
    %v403 = vld [vmem:[#allocation8 + $0x46c] sm:$0xf]
    %v404 = vld [vmem:[#allocation8 + $0x470] sm:$0xf]
    %v405 = vld [vmem:[#allocation8 + $0x474] sm:$0xf]
    %v406 = vld [vmem:[#allocation8 + $0x478] sm:$0xf]
    %v407 = vld [vmem:[#allocation8 + $0x47c] sm:$0xf]
    %v696 = vunpack.c.l.b16 %v120
    %v697 = vunpack.c.l.b16 %v121
    %v698 = vunpack.c.l.b16 %v122
    %v699 = vunpack.c.l.b16 %v123
    %v700 = vunpack.c.l.b16 %v124
    %v701 = vunpack.c.l.b16 %v125
    %v702 = vunpack.c.l.b16 %v126
    %v703 = vunpack.c.l.b16 %v127
    %v704 = vunpack.c.l.b16 %v128
    %v705 = vunpack.c.l.b16 %v129
    %v706 = vunpack.c.l.b16 %v130
    %v707 = vunpack.c.l.b16 %v131
    %v708 = vunpack.c.l.b16 %v132
    %v709 = vunpack.c.l.b16 %v133
    %v710 = vunpack.c.l.b16 %v134
    %v711 = vunpack.c.l.b16 %v135
    %v712 = vunpack.c.l.b16 %v136
    %v713 = vunpack.c.l.b16 %v137
    %v714 = vunpack.c.l.b16 %v138
    %v715 = vunpack.c.l.b16 %v139
    %v716 = vunpack.c.l.b16 %v140
    %v717 = vunpack.c.l.b16 %v141
    %v718 = vunpack.c.l.b16 %v142
    %v719 = vunpack.c.l.b16 %v143
    %v720 = vunpack.c.l.b16 %v144
    %v721 = vunpack.c.l.b16 %v145
    %v722 = vunpack.c.l.b16 %v146
    %v723 = vunpack.c.l.b16 %v147
    %v724 = vunpack.c.l.b16 %v148
    %v725 = vunpack.c.l.b16 %v149
    %v726 = vunpack.c.l.b16 %v150
    %v727 = vunpack.c.l.b16 %v151
    %v728 = vunpack.c.l.b16 %v152
    %v729 = vunpack.c.l.b16 %v153
    %v730 = vunpack.c.l.b16 %v154
    %v731 = vunpack.c.l.b16 %v155
    %v732 = vunpack.c.l.b16 %v156
    %v733 = vunpack.c.l.b16 %v157
    %v734 = vunpack.c.l.b16 %v158
    %v735 = vunpack.c.l.b16 %v159
    %v736 = vunpack.c.l.b16 %v160
    %v737 = vunpack.c.l.b16 %v161
    %v738 = vunpack.c.l.b16 %v162
    %v739 = vunpack.c.l.b16 %v163
    %v740 = vunpack.c.l.b16 %v164
    %v741 = vunpack.c.l.b16 %v165
    %v742 = vunpack.c.l.b16 %v166
    %v743 = vunpack.c.l.b16 %v167
    %v744 = vunpack.c.l.b16 %v168
    %v745 = vunpack.c.l.b16 %v169
    %v746 = vunpack.c.l.b16 %v170
    %v747 = vunpack.c.l.b16 %v171
    %v748 = vunpack.c.l.b16 %v172
    %v749 = vunpack.c.l.b16 %v173
    %v750 = vunpack.c.l.b16 %v174
    %v751 = vunpack.c.l.b16 %v175
    %v752 = vunpack.c.l.b16 %v176
    %v753 = vunpack.c.l.b16 %v177
    %v754 = vunpack.c.l.b16 %v178
    %v755 = vunpack.c.l.b16 %v179
    %v756 = vunpack.c.l.b16 %v180
    %v757 = vunpack.c.l.b16 %v181
    %v758 = vunpack.c.l.b16 %v182
    %v759 = vunpack.c.l.b16 %v183
    %v760 = vunpack.c.l.b16 %v184
    %v761 = vunpack.c.l.b16 %v185
    %v762 = vunpack.c.l.b16 %v186
    %v763 = vunpack.c.l.b16 %v187
    %v764 = vunpack.c.l.b16 %v188
    %v765 = vunpack.c.l.b16 %v189
    %v766 = vunpack.c.l.b16 %v190
    %v767 = vunpack.c.l.b16 %v191
    %v768 = vunpack.c.l.b16 %v192
    %v769 = vunpack.c.l.b16 %v193
    %v770 = vunpack.c.l.b16 %v194
    %v771 = vunpack.c.l.b16 %v195
    %v772 = vunpack.c.l.b16 %v196
    %v773 = vunpack.c.l.b16 %v197
    %v774 = vunpack.c.l.b16 %v198
    %v775 = vunpack.c.l.b16 %v199
    %v776 = vunpack.c.l.b16 %v200
    %v777 = vunpack.c.l.b16 %v201
    %v778 = vunpack.c.l.b16 %v202
    %v779 = vunpack.c.l.b16 %v203
    %v780 = vunpack.c.l.b16 %v204
    %v781 = vunpack.c.l.b16 %v205
    %v782 = vunpack.c.l.b16 %v206
    %v783 = vunpack.c.l.b16 %v207
    %v784 = vunpack.c.l.b16 %v208
    %v785 = vunpack.c.l.b16 %v209
    %v786 = vunpack.c.l.b16 %v210
    %v787 = vunpack.c.l.b16 %v211
    %v788 = vunpack.c.l.b16 %v212
    %v789 = vunpack.c.l.b16 %v213
    %v790 = vunpack.c.l.b16 %v214
    %v791 = vunpack.c.l.b16 %v215
    %v792 = vunpack.c.l.b16 %v216
    %v793 = vunpack.c.l.b16 %v217
    %v794 = vunpack.c.l.b16 %v218
    %v795 = vunpack.c.l.b16 %v219
    %v796 = vunpack.c.l.b16 %v220
    %v797 = vunpack.c.l.b16 %v221
    %v798 = vunpack.c.l.b16 %v222
    %v799 = vunpack.c.l.b16 %v223
    %v800 = vunpack.c.l.b16 %v224
    %v801 = vunpack.c.l.b16 %v225
    %v802 = vunpack.c.l.b16 %v226
    %v803 = vunpack.c.l.b16 %v227
    %v804 = vunpack.c.l.b16 %v228
    %v805 = vunpack.c.l.b16 %v229
    %v806 = vunpack.c.l.b16 %v230
    %v807 = vunpack.c.l.b16 %v231
    %v808 = vunpack.c.l.b16 %v232
    %v809 = vunpack.c.l.b16 %v233
    %v810 = vunpack.c.l.b16 %v234
    %v811 = vunpack.c.l.b16 %v235
    %v812 = vunpack.c.l.b16 %v236
    %v813 = vunpack.c.l.b16 %v237
    %v814 = vunpack.c.l.b16 %v238
    %v815 = vunpack.c.l.b16 %v239
    %v816 = vunpack.c.l.b16 %v240
    %v817 = vunpack.c.l.b16 %v241
    %v818 = vunpack.c.l.b16 %v242
    %v819 = vunpack.c.l.b16 %v243
    %v820 = vunpack.c.l.b16 %v244
    %v821 = vunpack.c.l.b16 %v245
    %v822 = vunpack.c.l.b16 %v246
    %v823 = vunpack.c.l.b16 %v247
    %v824 = vunpack.c.l.b16 %v248
    %v825 = vunpack.c.l.b16 %v249
    %v826 = vunpack.c.l.b16 %v250
    %v827 = vunpack.c.l.b16 %v251
    %v828 = vunpack.c.l.b16 %v252
    %v829 = vunpack.c.l.b16 %v253
    %v830 = vunpack.c.l.b16 %v254
    %v831 = vunpack.c.l.b16 %v255
    %v832 = vunpack.c.l.b16 %v256
    %v833 = vunpack.c.l.b16 %v257
    %v834 = vunpack.c.l.b16 %v258
    %v835 = vunpack.c.l.b16 %v259
    %v836 = vunpack.c.l.b16 %v260
    %v837 = vunpack.c.l.b16 %v261
    %v838 = vunpack.c.l.b16 %v262
    %v839 = vunpack.c.l.b16 %v263
    %v840 = vunpack.c.l.b16 %v264
    %v841 = vunpack.c.l.b16 %v265
    %v842 = vunpack.c.l.b16 %v266
    %v843 = vunpack.c.l.b16 %v267
    %v844 = vunpack.c.l.b16 %v268
    %v845 = vunpack.c.l.b16 %v269
    %v846 = vunpack.c.l.b16 %v270
    %v847 = vunpack.c.l.b16 %v271
    %v848 = vunpack.c.l.b16 %v272
    %v849 = vunpack.c.l.b16 %v273
    %v850 = vunpack.c.l.b16 %v274
    %v851 = vunpack.c.l.b16 %v275
    %v852 = vunpack.c.l.b16 %v276
    %v853 = vunpack.c.l.b16 %v277
    %v854 = vunpack.c.l.b16 %v278
    %v855 = vunpack.c.l.b16 %v279
    %v856 = vunpack.c.l.b16 %v280
    %v857 = vunpack.c.l.b16 %v281
    %v858 = vunpack.c.l.b16 %v282
    %v859 = vunpack.c.l.b16 %v283
    %v860 = vunpack.c.l.b16 %v284
    %v861 = vunpack.c.l.b16 %v285
    %v862 = vunpack.c.l.b16 %v286
    %v863 = vunpack.c.l.b16 %v287
    %v864 = vunpack.c.l.b16 %v288
    %v865 = vunpack.c.l.b16 %v289
    %v866 = vunpack.c.l.b16 %v290
    %v867 = vunpack.c.l.b16 %v291
    %v868 = vunpack.c.l.b16 %v292
    %v869 = vunpack.c.l.b16 %v293
    %v870 = vunpack.c.l.b16 %v294
    %v871 = vunpack.c.l.b16 %v295
    %v872 = vunpack.c.l.b16 %v296
    %v873 = vunpack.c.l.b16 %v297
    %v874 = vunpack.c.l.b16 %v298
    %v875 = vunpack.c.l.b16 %v299
    %v876 = vunpack.c.l.b16 %v300
    %v877 = vunpack.c.l.b16 %v301
    %v878 = vunpack.c.l.b16 %v302
    %v879 = vunpack.c.l.b16 %v303
    %v880 = vunpack.c.l.b16 %v304
    %v881 = vunpack.c.l.b16 %v305
    %v882 = vunpack.c.l.b16 %v306
    %v883 = vunpack.c.l.b16 %v307
    %v884 = vunpack.c.l.b16 %v308
    %v885 = vunpack.c.l.b16 %v309
    %v886 = vunpack.c.l.b16 %v310
    %v887 = vunpack.c.l.b16 %v311
    %v888 = vunpack.c.l.b16 %v312
    %v889 = vunpack.c.l.b16 %v313
    %v890 = vunpack.c.l.b16 %v314
    %v891 = vunpack.c.l.b16 %v315
    %v892 = vunpack.c.l.b16 %v316
    %v893 = vunpack.c.l.b16 %v317
    %v894 = vunpack.c.l.b16 %v318
    %v895 = vunpack.c.l.b16 %v319
    %v896 = vunpack.c.l.b16 %v320
    %v897 = vunpack.c.l.b16 %v321
    %v898 = vunpack.c.l.b16 %v322
    %v899 = vunpack.c.l.b16 %v323
    %v900 = vunpack.c.l.b16 %v324
    %v901 = vunpack.c.l.b16 %v325
    %v902 = vunpack.c.l.b16 %v326
    %v903 = vunpack.c.l.b16 %v327
    %v904 = vunpack.c.l.b16 %v328
    %v905 = vunpack.c.l.b16 %v329
    %v906 = vunpack.c.l.b16 %v330
    %v907 = vunpack.c.l.b16 %v331
    %v908 = vunpack.c.l.b16 %v332
    %v909 = vunpack.c.l.b16 %v333
    %v910 = vunpack.c.l.b16 %v334
    %v911 = vunpack.c.l.b16 %v335
    %v912 = vunpack.c.l.b16 %v336
    %v913 = vunpack.c.l.b16 %v337
    %v914 = vunpack.c.l.b16 %v338
    %v915 = vunpack.c.l.b16 %v339
    %v916 = vunpack.c.l.b16 %v340
    %v917 = vunpack.c.l.b16 %v341
    %v918 = vunpack.c.l.b16 %v342
    %v919 = vunpack.c.l.b16 %v343
    %v920 = vunpack.c.l.b16 %v344
    %v921 = vunpack.c.l.b16 %v345
    %v922 = vunpack.c.l.b16 %v346
    %v923 = vunpack.c.l.b16 %v347
    %v924 = vunpack.c.l.b16 %v348
    %v925 = vunpack.c.l.b16 %v349
    %v926 = vunpack.c.l.b16 %v350
    %v927 = vunpack.c.l.b16 %v351
    %v928 = vunpack.c.l.b16 %v352
    %v929 = vunpack.c.l.b16 %v353
    %v930 = vunpack.c.l.b16 %v354
    %v931 = vunpack.c.l.b16 %v355
    %v932 = vunpack.c.l.b16 %v356
    %v933 = vunpack.c.l.b16 %v357
    %v934 = vunpack.c.l.b16 %v358
    %v935 = vunpack.c.l.b16 %v359
    %v936 = vunpack.c.l.b16 %v360
    %v937 = vunpack.c.l.b16 %v361
    %v938 = vunpack.c.l.b16 %v362
    %v939 = vunpack.c.l.b16 %v363
    %v940 = vunpack.c.l.b16 %v364
    %v941 = vunpack.c.l.b16 %v365
    %v942 = vunpack.c.l.b16 %v366
    %v943 = vunpack.c.l.b16 %v367
    %v944 = vunpack.c.l.b16 %v368
    %v945 = vunpack.c.l.b16 %v369
    %v946 = vunpack.c.l.b16 %v370
    %v947 = vunpack.c.l.b16 %v371
    %v948 = vunpack.c.l.b16 %v372
    %v949 = vunpack.c.l.b16 %v373
    %v950 = vunpack.c.l.b16 %v374
    %v951 = vunpack.c.l.b16 %v375
    %v952 = vunpack.c.l.b16 %v376
    %v953 = vunpack.c.l.b16 %v377
    %v954 = vunpack.c.l.b16 %v378
    %v955 = vunpack.c.l.b16 %v379
    %v956 = vunpack.c.l.b16 %v380
    %v957 = vunpack.c.l.b16 %v381
    %v958 = vunpack.c.l.b16 %v382
    %v959 = vunpack.c.l.b16 %v383
    %v960 = vunpack.c.l.b16 %v384
    %v961 = vunpack.c.l.b16 %v385
    %v962 = vunpack.c.l.b16 %v386
    %v963 = vunpack.c.l.b16 %v387
    %v964 = vunpack.c.l.b16 %v388
    %v965 = vunpack.c.l.b16 %v389
    %v966 = vunpack.c.l.b16 %v390
    %v967 = vunpack.c.l.b16 %v391
    %v968 = vunpack.c.l.b16 %v392
    %v969 = vunpack.c.l.b16 %v393
    %v970 = vunpack.c.l.b16 %v394
    %v971 = vunpack.c.l.b16 %v395
    %v972 = vunpack.c.l.b16 %v396
    %v973 = vunpack.c.l.b16 %v397
    %v974 = vunpack.c.l.b16 %v398
    %v975 = vunpack.c.l.b16 %v399
    %v976 = vunpack.c.l.b16 %v400
    %v977 = vunpack.c.l.b16 %v401
    %v978 = vunpack.c.l.b16 %v402
    %v979 = vunpack.c.l.b16 %v403
    %v980 = vunpack.c.l.b16 %v404
    %v981 = vunpack.c.l.b16 %v405
    %v982 = vunpack.c.l.b16 %v406
    %v983 = vunpack.c.l.b16 %v407
    %v984 = vpack.c.b16 %v697, %v696
    %v985 = vpack.c.b16 %v699, %v698
    %v986 = vpack.c.b16 %v701, %v700
    %v987 = vpack.c.b16 %v703, %v702
    %v988 = vpack.c.b16 %v705, %v704
    %v989 = vpack.c.b16 %v707, %v706
    %v990 = vpack.c.b16 %v709, %v708
    %v991 = vpack.c.b16 %v711, %v710
    %v992 = vpack.c.b16 %v713, %v712
    %v993 = vpack.c.b16 %v715, %v714
    %v994 = vpack.c.b16 %v717, %v716
    %v995 = vpack.c.b16 %v719, %v718
    %v996 = vpack.c.b16 %v721, %v720
    %v997 = vpack.c.b16 %v723, %v722
    %v998 = vpack.c.b16 %v725, %v724
    %v999 = vpack.c.b16 %v727, %v726
    %v1000 = vpack.c.b16 %v729, %v728
    %v1001 = vpack.c.b16 %v731, %v730
    %v1002 = vpack.c.b16 %v733, %v732
    %v1003 = vpack.c.b16 %v735, %v734
    %v1004 = vpack.c.b16 %v737, %v736
    %v1005 = vpack.c.b16 %v739, %v738
    %v1006 = vpack.c.b16 %v741, %v740
    %v1007 = vpack.c.b16 %v743, %v742
    %v1008 = vpack.c.b16 %v745, %v744
    %v1009 = vpack.c.b16 %v747, %v746
    %v1010 = vpack.c.b16 %v749, %v748
    %v1011 = vpack.c.b16 %v751, %v750
    %v1012 = vpack.c.b16 %v753, %v752
    %v1013 = vpack.c.b16 %v755, %v754
    %v1014 = vpack.c.b16 %v757, %v756
    %v1015 = vpack.c.b16 %v759, %v758
    %v1016 = vpack.c.b16 %v761, %v760
    %v1017 = vpack.c.b16 %v763, %v762
    %v1018 = vpack.c.b16 %v765, %v764
    %v1019 = vpack.c.b16 %v767, %v766
    %v1020 = vpack.c.b16 %v769, %v768
    %v1021 = vpack.c.b16 %v771, %v770
    %v1022 = vpack.c.b16 %v773, %v772
    %v1023 = vpack.c.b16 %v775, %v774
    %v1024 = vpack.c.b16 %v777, %v776
    %v1025 = vpack.c.b16 %v779, %v778
    %v1026 = vpack.c.b16 %v781, %v780
    %v1027 = vpack.c.b16 %v783, %v782
    %v1028 = vpack.c.b16 %v785, %v784
    %v1029 = vpack.c.b16 %v787, %v786
    %v1030 = vpack.c.b16 %v789, %v788
    %v1031 = vpack.c.b16 %v791, %v790
    %v1032 = vpack.c.b16 %v793, %v792
    %v1033 = vpack.c.b16 %v795, %v794
    %v1034 = vpack.c.b16 %v797, %v796
    %v1035 = vpack.c.b16 %v799, %v798
    %v1036 = vpack.c.b16 %v801, %v800
    %v1037 = vpack.c.b16 %v803, %v802
    %v1038 = vpack.c.b16 %v805, %v804
    %v1039 = vpack.c.b16 %v807, %v806
    %v1040 = vpack.c.b16 %v809, %v808
    %v1041 = vpack.c.b16 %v811, %v810
    %v1042 = vpack.c.b16 %v813, %v812
    %v1043 = vpack.c.b16 %v815, %v814
    %v1044 = vpack.c.b16 %v817, %v816
    %v1045 = vpack.c.b16 %v819, %v818
    %v1046 = vpack.c.b16 %v821, %v820
    %v1047 = vpack.c.b16 %v823, %v822
    %v1048 = vpack.c.b16 %v825, %v824
    %v1049 = vpack.c.b16 %v827, %v826
    %v1050 = vpack.c.b16 %v829, %v828
    %v1051 = vpack.c.b16 %v831, %v830
    %v1052 = vpack.c.b16 %v833, %v832
    %v1053 = vpack.c.b16 %v835, %v834
    %v1054 = vpack.c.b16 %v837, %v836
    %v1055 = vpack.c.b16 %v839, %v838
    %v1056 = vpack.c.b16 %v841, %v840
    %v1057 = vpack.c.b16 %v843, %v842
    %v1058 = vpack.c.b16 %v845, %v844
    %v1059 = vpack.c.b16 %v847, %v846
    %v1060 = vpack.c.b16 %v849, %v848
    %v1061 = vpack.c.b16 %v851, %v850
    %v1062 = vpack.c.b16 %v853, %v852
    %v1063 = vpack.c.b16 %v855, %v854
    %v1064 = vpack.c.b16 %v857, %v856
    %v1065 = vpack.c.b16 %v859, %v858
    %v1066 = vpack.c.b16 %v861, %v860
    %v1067 = vpack.c.b16 %v863, %v862
    %v1068 = vpack.c.b16 %v865, %v864
    %v1069 = vpack.c.b16 %v867, %v866
    %v1070 = vpack.c.b16 %v869, %v868
    %v1071 = vpack.c.b16 %v871, %v870
    %v1072 = vpack.c.b16 %v873, %v872
    %v1073 = vpack.c.b16 %v875, %v874
    %v1074 = vpack.c.b16 %v877, %v876
    %v1075 = vpack.c.b16 %v879, %v878
    %v1076 = vpack.c.b16 %v881, %v880
    %v1077 = vpack.c.b16 %v883, %v882
    %v1078 = vpack.c.b16 %v885, %v884
    %v1079 = vpack.c.b16 %v887, %v886
    %v1080 = vpack.c.b16 %v889, %v888
    %v1081 = vpack.c.b16 %v891, %v890
    %v1082 = vpack.c.b16 %v893, %v892
    %v1083 = vpack.c.b16 %v895, %v894
    %v1084 = vpack.c.b16 %v897, %v896
    %v1085 = vpack.c.b16 %v899, %v898
    %v1086 = vpack.c.b16 %v901, %v900
    %v1087 = vpack.c.b16 %v903, %v902
    %v1088 = vpack.c.b16 %v905, %v904
    %v1089 = vpack.c.b16 %v907, %v906
    %v1090 = vpack.c.b16 %v909, %v908
    %v1091 = vpack.c.b16 %v911, %v910
    %v1092 = vpack.c.b16 %v913, %v912
    %v1093 = vpack.c.b16 %v915, %v914
    %v1094 = vpack.c.b16 %v917, %v916
    %v1095 = vpack.c.b16 %v919, %v918
    %v1096 = vpack.c.b16 %v921, %v920
    %v1097 = vpack.c.b16 %v923, %v922
    %v1098 = vpack.c.b16 %v925, %v924
    %v1099 = vpack.c.b16 %v927, %v926
    %v1100 = vpack.c.b16 %v929, %v928
    %v1101 = vpack.c.b16 %v931, %v930
    %v1102 = vpack.c.b16 %v933, %v932
    %v1103 = vpack.c.b16 %v935, %v934
    %v1104 = vpack.c.b16 %v937, %v936
    %v1105 = vpack.c.b16 %v939, %v938
    %v1106 = vpack.c.b16 %v941, %v940
    %v1107 = vpack.c.b16 %v943, %v942
    %v1108 = vpack.c.b16 %v945, %v944
    %v1109 = vpack.c.b16 %v947, %v946
    %v1110 = vpack.c.b16 %v949, %v948
    %v1111 = vpack.c.b16 %v951, %v950
    %v1112 = vpack.c.b16 %v953, %v952
    %v1113 = vpack.c.b16 %v955, %v954
    %v1114 = vpack.c.b16 %v957, %v956
    %v1115 = vpack.c.b16 %v959, %v958
    %v1116 = vpack.c.b16 %v961, %v960
    %v1117 = vpack.c.b16 %v963, %v962
    %v1118 = vpack.c.b16 %v965, %v964
    %v1119 = vpack.c.b16 %v967, %v966
    %v1120 = vpack.c.b16 %v969, %v968
    %v1121 = vpack.c.b16 %v971, %v970
    %v1122 = vpack.c.b16 %v973, %v972
    %v1123 = vpack.c.b16 %v975, %v974
    %v1124 = vpack.c.b16 %v977, %v976
    %v1125 = vpack.c.b16 %v979, %v978
    %v1126 = vpack.c.b16 %v981, %v980
    %v1127 = vpack.c.b16 %v983, %v982
    %1272 = vmatpush.bf16.msra.mxu0 %v991
    %1273 = vmatpush.bf16.msra.mxu0 %v990
    %1274 = vmatpush.bf16.msra.mxu0 %v989
    %1275 = vmatpush.bf16.msra.mxu0 %v988
    %1276 = vmatpush.bf16.msra.mxu0 %v987
    %1277 = vmatpush.bf16.msra.mxu0 %v986
    %1278 = vmatpush.bf16.msra.mxu0 %v985
    %1279 = vmatpush.bf16.msra.mxu0 %v984
    %1280 = vmatmul.bf16.gmra.mxu0 %v80
    %v1281 = vpop.f32.mrf.mxu0
    %v1282 = vadd.f32 0.0, %v1281
    %v1283 = vpop.f32.mrf.mxu0
    %1284 = vdwg.mxu0
    %1285 = vmatpush.bf16.msra.mxu0 %v999
    %1286 = vmatpush.bf16.msra.mxu0 %v998
    %1287 = vmatpush.bf16.msra.mxu0 %v997
    %1288 = vmatpush.bf16.msra.mxu0 %v996
    %1289 = vmatpush.bf16.msra.mxu0 %v995
    %1290 = vmatpush.bf16.msra.mxu0 %v994
    %1291 = vmatpush.bf16.msra.mxu0 %v993
    %1292 = vmatpush.bf16.msra.mxu0 %v992
    %1293 = vmatmul.bf16.gmra.mxu0 %v81
    %v1294 = vpop.f32.mrf.mxu0
    %v1295 = vadd.f32 %v1282, %v1294
    %v1296 = vpop.f32.mrf.mxu0
    %1297 = vdwg.mxu0
    %1298 = vmatpush.bf16.msra.mxu0 %v1007
    %1299 = vmatpush.bf16.msra.mxu0 %v1006
    %1300 = vmatpush.bf16.msra.mxu0 %v1005
    %1301 = vmatpush.bf16.msra.mxu0 %v1004
    %1302 = vmatpush.bf16.msra.mxu0 %v1003
    %1303 = vmatpush.bf16.msra.mxu0 %v1002
    %1304 = vmatpush.bf16.msra.mxu0 %v1001
    %1305 = vmatpush.bf16.msra.mxu0 %v1000
    %1306 = vmatmul.bf16.gmra.mxu0 %v82
    %v1307 = vpop.f32.mrf.mxu0
    %v1308 = vadd.f32 %v1295, %v1307
    %v1309 = vpop.f32.mrf.mxu0
    %1310 = vdwg.mxu0
    %1311 = vmatpush.bf16.msra.mxu0 %v1015
    %1312 = vmatpush.bf16.msra.mxu0 %v1014
    %1313 = vmatpush.bf16.msra.mxu0 %v1013
    %1314 = vmatpush.bf16.msra.mxu0 %v1012
    %1315 = vmatpush.bf16.msra.mxu0 %v1011
    %1316 = vmatpush.bf16.msra.mxu0 %v1010
    %1317 = vmatpush.bf16.msra.mxu0 %v1009
    %1318 = vmatpush.bf16.msra.mxu0 %v1008
    %1319 = vmatmul.bf16.gmra.mxu0 %v83
    %v1320 = vpop.f32.mrf.mxu0
    %v1321 = vadd.f32 %v1308, %v1320
    %v1322 = vpop.f32.mrf.mxu0
    %1323 = vdwg.mxu0
    %1324 = vmatpush.bf16.msra.mxu0 %v1023
    %1325 = vmatpush.bf16.msra.mxu0 %v1022
    %1326 = vmatpush.bf16.msra.mxu0 %v1021
    %1327 = vmatpush.bf16.msra.mxu0 %v1020
    %1328 = vmatpush.bf16.msra.mxu0 %v1019
    %1329 = vmatpush.bf16.msra.mxu0 %v1018
    %1330 = vmatpush.bf16.msra.mxu0 %v1017
    %1331 = vmatpush.bf16.msra.mxu0 %v1016
    %1332 = vmatmul.bf16.gmra.mxu0 %v84
    %v1333 = vpop.f32.mrf.mxu0
    %v1334 = vadd.f32 %v1321, %v1333
    %v1335 = vpop.f32.mrf.mxu0
    %1336 = vdwg.mxu0
    %1337 = vmatpush.bf16.msra.mxu0 %v1031
    %1338 = vmatpush.bf16.msra.mxu0 %v1030
    %1339 = vmatpush.bf16.msra.mxu0 %v1029
    %1340 = vmatpush.bf16.msra.mxu0 %v1028
    %1341 = vmatpush.bf16.msra.mxu0 %v1027
    %1342 = vmatpush.bf16.msra.mxu0 %v1026
    %1343 = vmatpush.bf16.msra.mxu0 %v1025
    %1344 = vmatpush.bf16.msra.mxu0 %v1024
    %1345 = vmatmul.bf16.gmra.mxu0 %v85
    %v1346 = vpop.f32.mrf.mxu0
    %v1347 = vadd.f32 %v1334, %v1346
    %v1348 = vpop.f32.mrf.mxu0
    %1349 = vdwg.mxu0
    %1350 = vmatpush.bf16.msra.mxu0 %v1039
    %1351 = vmatpush.bf16.msra.mxu0 %v1038
    %1352 = vmatpush.bf16.msra.mxu0 %v1037
    %1353 = vmatpush.bf16.msra.mxu0 %v1036
    %1354 = vmatpush.bf16.msra.mxu0 %v1035
    %1355 = vmatpush.bf16.msra.mxu0 %v1034
    %1356 = vmatpush.bf16.msra.mxu0 %v1033
    %1357 = vmatpush.bf16.msra.mxu0 %v1032
    %1358 = vmatmul.bf16.gmra.mxu0 %v94
    %v1359 = vpop.f32.mrf.mxu0
    %v1360 = vadd.f32 %v1347, %v1359
    %v1361 = vpop.f32.mrf.mxu0
    %1362 = vdwg.mxu0
    %1363 = vmatpush.bf16.msra.mxu0 %v1047
    %1364 = vmatpush.bf16.msra.mxu0 %v1046
    %1365 = vmatpush.bf16.msra.mxu0 %v1045
    %1366 = vmatpush.bf16.msra.mxu0 %v1044
    %1367 = vmatpush.bf16.msra.mxu0 %v1043
    %1368 = vmatpush.bf16.msra.mxu0 %v1042
    %1369 = vmatpush.bf16.msra.mxu0 %v1041
    %1370 = vmatpush.bf16.msra.mxu0 %v1040
    %1371 = vmatmul.bf16.gmra.mxu0 %v95
    %v1372 = vpop.f32.mrf.mxu0
    %v1373 = vadd.f32 %v1360, %v1372
    %v1374 = vpop.f32.mrf.mxu0
    %1375 = vdwg.mxu0
    %1376 = vmatpush.bf16.msra.mxu0 %v1055
    %1377 = vmatpush.bf16.msra.mxu0 %v1054
    %1378 = vmatpush.bf16.msra.mxu0 %v1053
    %1379 = vmatpush.bf16.msra.mxu0 %v1052
    %1380 = vmatpush.bf16.msra.mxu0 %v1051
    %1381 = vmatpush.bf16.msra.mxu0 %v1050
    %1382 = vmatpush.bf16.msra.mxu0 %v1049
    %1383 = vmatpush.bf16.msra.mxu0 %v1048
    %1384 = vmatmul.bf16.gmra.mxu0 %v96
    %v1385 = vpop.f32.mrf.mxu0
    %v1386 = vadd.f32 %v1373, %v1385
    %v1387 = vpop.f32.mrf.mxu0
    %1388 = vdwg.mxu0
    %1389 = vmatpush.bf16.msra.mxu0 %v1063
    %1390 = vmatpush.bf16.msra.mxu0 %v1062
    %1391 = vmatpush.bf16.msra.mxu0 %v1061
    %1392 = vmatpush.bf16.msra.mxu0 %v1060
    %1393 = vmatpush.bf16.msra.mxu0 %v1059
    %1394 = vmatpush.bf16.msra.mxu0 %v1058
    %1395 = vmatpush.bf16.msra.mxu0 %v1057
    %1396 = vmatpush.bf16.msra.mxu0 %v1056
    %1397 = vmatmul.bf16.gmra.mxu0 %v97
    %v1398 = vpop.f32.mrf.mxu0
    %v1399 = vadd.f32 %v1386, %v1398
    %v1400 = vpop.f32.mrf.mxu0
    %1401 = vdwg.mxu0
    %1402 = vmatpush.bf16.msra.mxu0 %v1071
    %1403 = vmatpush.bf16.msra.mxu0 %v1070
    %1404 = vmatpush.bf16.msra.mxu0 %v1069
    %1405 = vmatpush.bf16.msra.mxu0 %v1068
    %1406 = vmatpush.bf16.msra.mxu0 %v1067
    %1407 = vmatpush.bf16.msra.mxu0 %v1066
    %1408 = vmatpush.bf16.msra.mxu0 %v1065
    %1409 = vmatpush.bf16.msra.mxu0 %v1064
    %1410 = vmatmul.bf16.gmra.mxu0 %v98
    %v1411 = vpop.f32.mrf.mxu0
    %v1412 = vadd.f32 %v1399, %v1411
    %v1413 = vpop.f32.mrf.mxu0
    %1414 = vdwg.mxu0
    %1415 = vmatpush.bf16.msra.mxu0 %v1079
    %1416 = vmatpush.bf16.msra.mxu0 %v1078
    %1417 = vmatpush.bf16.msra.mxu0 %v1077
    %1418 = vmatpush.bf16.msra.mxu0 %v1076
    %1419 = vmatpush.bf16.msra.mxu0 %v1075
    %1420 = vmatpush.bf16.msra.mxu0 %v1074
    %1421 = vmatpush.bf16.msra.mxu0 %v1073
    %1422 = vmatpush.bf16.msra.mxu0 %v1072
    %1423 = vmatmul.bf16.gmra.mxu0 %v99
    %v1424 = vpop.f32.mrf.mxu0
    %v1425 = vadd.f32 %v1412, %v1424
    %v1426 = vpop.f32.mrf.mxu0
    %1427 = vdwg.mxu0
    %1428 = vmatpush.bf16.msra.mxu0 %v1087
    %1429 = vmatpush.bf16.msra.mxu0 %v1086
    %1430 = vmatpush.bf16.msra.mxu0 %v1085
    %1431 = vmatpush.bf16.msra.mxu0 %v1084
    %1432 = vmatpush.bf16.msra.mxu0 %v1083
    %1433 = vmatpush.bf16.msra.mxu0 %v1082
    %1434 = vmatpush.bf16.msra.mxu0 %v1081
    %1435 = vmatpush.bf16.msra.mxu0 %v1080
    %1436 = vmatmul.bf16.gmra.mxu0 %v108
    %v1437 = vpop.f32.mrf.mxu0
    %v1438 = vadd.f32 %v1425, %v1437
    %v1439 = vpop.f32.mrf.mxu0
    %1440 = vdwg.mxu0
    %1441 = vmatpush.bf16.msra.mxu0 %v1095
    %1442 = vmatpush.bf16.msra.mxu0 %v1094
    %1443 = vmatpush.bf16.msra.mxu0 %v1093
    %1444 = vmatpush.bf16.msra.mxu0 %v1092
    %1445 = vmatpush.bf16.msra.mxu0 %v1091
    %1446 = vmatpush.bf16.msra.mxu0 %v1090
    %1447 = vmatpush.bf16.msra.mxu0 %v1089
    %1448 = vmatpush.bf16.msra.mxu0 %v1088
    %1449 = vmatmul.bf16.gmra.mxu0 %v109
    %v1450 = vpop.f32.mrf.mxu0
    %v1451 = vadd.f32 %v1438, %v1450
    %v1452 = vpop.f32.mrf.mxu0
    %1453 = vdwg.mxu0
    %1454 = vmatpush.bf16.msra.mxu0 %v1103
    %1455 = vmatpush.bf16.msra.mxu0 %v1102
    %1456 = vmatpush.bf16.msra.mxu0 %v1101
    %1457 = vmatpush.bf16.msra.mxu0 %v1100
    %1458 = vmatpush.bf16.msra.mxu0 %v1099
    %1459 = vmatpush.bf16.msra.mxu0 %v1098
    %1460 = vmatpush.bf16.msra.mxu0 %v1097
    %1461 = vmatpush.bf16.msra.mxu0 %v1096
    %1462 = vmatmul.bf16.gmra.mxu0 %v110
    %v1463 = vpop.f32.mrf.mxu0
    %v1464 = vadd.f32 %v1451, %v1463
    %v1465 = vpop.f32.mrf.mxu0
    %1466 = vdwg.mxu0
    %1467 = vmatpush.bf16.msra.mxu0 %v1111
    %1468 = vmatpush.bf16.msra.mxu0 %v1110
    %1469 = vmatpush.bf16.msra.mxu0 %v1109
    %1470 = vmatpush.bf16.msra.mxu0 %v1108
    %1471 = vmatpush.bf16.msra.mxu0 %v1107
    %1472 = vmatpush.bf16.msra.mxu0 %v1106
    %1473 = vmatpush.bf16.msra.mxu0 %v1105
    %1474 = vmatpush.bf16.msra.mxu0 %v1104
    %1475 = vmatmul.bf16.gmra.mxu0 %v111
    %v1476 = vpop.f32.mrf.mxu0
    %v1477 = vadd.f32 %v1464, %v1476
    %v1478 = vpop.f32.mrf.mxu0
    %1479 = vdwg.mxu0
    %1480 = vmatpush.bf16.msra.mxu0 %v1119
    %1481 = vmatpush.bf16.msra.mxu0 %v1118
    %1482 = vmatpush.bf16.msra.mxu0 %v1117
    %1483 = vmatpush.bf16.msra.mxu0 %v1116
    %1484 = vmatpush.bf16.msra.mxu0 %v1115
    %1485 = vmatpush.bf16.msra.mxu0 %v1114
    %1486 = vmatpush.bf16.msra.mxu0 %v1113
    %1487 = vmatpush.bf16.msra.mxu0 %v1112
    %1488 = vmatmul.bf16.gmra.mxu0 %v112
    %v1489 = vpop.f32.mrf.mxu0
    %v1490 = vadd.f32 %v1477, %v1489
    %v1491 = vpop.f32.mrf.mxu0
    %1492 = vdwg.mxu0
    %1493 = vmatpush.bf16.msra.mxu0 %v1127
    %1494 = vmatpush.bf16.msra.mxu0 %v1126
    %1495 = vmatpush.bf16.msra.mxu0 %v1125
    %1496 = vmatpush.bf16.msra.mxu0 %v1124
    %1497 = vmatpush.bf16.msra.mxu0 %v1123
    %1498 = vmatpush.bf16.msra.mxu0 %v1122
    %1499 = vmatpush.bf16.msra.mxu0 %v1121
    %1500 = vmatpush.bf16.msra.mxu0 %v1120
    %1501 = vmatmul.bf16.gmra.mxu0 %v113
    %v1502 = vpop.f32.mrf.mxu0
    %v1503 = vadd.f32 %v1490, %v1502
    %v1504 = vpop.f32.mrf.mxu0
    %1505 = vdwg.mxu0
    %1506 = vst [vmem:[#allocation10] sm:$0x3] %v1503
    // Predicated region
    $region34: #{tpu_custom_call.1} parent=1 // pred_check
      _
    $region35: #{tpu_custom_call.1} parent=1 // pred_check_branch
      %1508 = sbr.rel (0) target = $region37
    $region36: #{tpu_custom_call.1} parent=1 // pred_region
      %1510 = vsyncadd [#allocation4], 0
      %s1512 = sshll.u32 [#allocation10], 4
      %s1513 = int_to_ptr.vmem [resolvable:$true] %s1512
      %s1514 = sshll.u32 %s4, 4
      %s1515 = int_to_ptr.hbm [resolvable:$true] %s1514
      %1517 = dma.vmem_to_hbm [thread:$0]  %s1513, 32, %s1515, [#allocation4]
    $region37: #{tpu_custom_call.1} parent=1 // pred_fallthru
      _
    // Predicated region
    $region38: #{tpu_custom_call.1} parent=1 // pred_check
      _
    $region39: #{tpu_custom_call.1} parent=1 // pred_check_branch
      %1519 = sbr.rel (0) target = $region41
    $region40: #{tpu_custom_call.1} parent=1 // pred_region
      %1521 = dma.done [#allocation4], 32
    $region41: #{tpu_custom_call.1} parent=1 // pred_fallthru
      _
    %1522 = vsyncpa [#allocation3], 1
    %1523 = vsyncpa [#allocation6], 1
    %1524 = vsyncpa [#allocation9], 1
    %1525 = vsyncpa [#allocation4], 1

</llo_original>
